<compile_context>
chip_gen: v6e
topology: v6e:2x2x1
jax: 0.10.0
libtpu: 0.0.40
codegen_flags: <defaults>
</compile_context>

<pallas_src>
import math
from typing import NamedTuple

import jax
import jax.numpy as jnp
from jax.experimental import pallas as pl
from jax.experimental.pallas import tpu as pltpu


# ---------------------------------------------------------------------------
# Kernels
# ---------------------------------------------------------------------------
def _z_loc_kernel(z_ref, w_ref, b_ref, loc_ref):
    """loc = z_packed @ W_blockdiag + b_packed  (one MXU matmul + VPU add)."""
    loc = jnp.dot(z_ref[...].astype(jnp.float32), w_ref[...],
                  preferred_element_type=jnp.float32) + b_ref[...]
    loc_ref[...] = loc.astype(loc_ref.dtype)


def _ids_loc_kernel(ids_ref, e_ref, code_ref, w_ref, b_ref, loc_ref):
    """Packed one-hot rebuilt from int32 ids in vregs, then the same matmul.

    ids_rep[r, c] = ids[r, c // S]   (tiny matmul against the 0/1 "expand" E)
    onehot[r, c]  = ids_rep[r, c] == (c % S)   (compare against constant code row)
    Exact for num_states <= 256 (integers exact in any MXU precision pass).
    """
    ids_rep = jnp.dot(ids_ref[...].astype(jnp.float32), e_ref[...],
                      preferred_element_type=jnp.float32)          # (Tp, R*S)
    onehot = (ids_rep == code_ref[...]).astype(jnp.float32)        # (Tp, R*S)
    loc = jnp.dot(onehot, w_ref[...],
                  preferred_element_type=jnp.float32) + b_ref[...]
    loc_ref[...] = loc.astype(loc_ref.dtype)


# ---------------------------------------------------------------------------
# Wrapper helpers
# ---------------------------------------------------------------------------
class NormalParams(NamedTuple):
    """Normal(loc, scale); scale is (obs_dim,) and broadcasts over steps."""
    loc: jax.Array    # (num_steps, obs_dim)
    scale: jax.Array  # (obs_dim,)


def _pack_factor(num_steps, num_states, obs_dim, max_wbd_bytes=4 << 20):
    """Smallest R with (R*obs_dim) % 128 == 0 that divides num_steps, else 1."""
    r = 128 // math.gcd(obs_dim, 128)
    if r == 1:
        return 1
    if num_steps % r != 0:
        return 1
    if (r * num_states) * (r * obs_dim) * 4 > max_wbd_bytes:
        return 1  # keep the resident block-diagonal weight small in VMEM
    return r


def _packed_weights(weight, bias, r):
    """Block-diagonal W (R copies of W on the diagonal) and tiled bias row."""
    s, d = weight.shape
    w = weight.astype(jnp.float32)
    if r == 1:
        w_bd = w
    else:
        eye = jnp.eye(r, dtype=jnp.float32)
        w_bd = jnp.einsum('ij,sd->isjd', eye, w).reshape(r * s, r * d)
    b_packed = jnp.tile(bias.astype(jnp.float32), r).reshape(1, r * d)
    return w_bd, b_packed


def _pick_block_rows(n_rows):
    if n_rows % 8 != 0:
        return n_rows  # single full block (block dims == array dims is legal)
    for cand in (1024, 512, 256, 128, 64, 32, 16, 8):
        if n_rows % cand == 0:
            return cand
    return n_rows


def _resolve_block_rows(n_rows, block_rows):
    if block_rows is None:
        block_rows = _pick_block_rows(n_rows)
    assert n_rows % block_rows == 0, "block_rows must divide the packed row count"
    assert block_rows == n_rows or block_rows % 8 == 0
    return block_rows


# ---------------------------------------------------------------------------
# Public entry points
# ---------------------------------------------------------------------------
def hmm_forward(z, weight, bias, log_scale, *, block_rows=None,
                out_dtype=jnp.float32):
    """HMM.forward(z) = observation_model(z).

    Args:
      z:         (num_steps, num_states) one-hot hidden states.
      weight:    (num_states, obs_dim)   linear weight (transpose of PyTorch's
                                         nn.Linear (obs_dim, num_states) weight).
      bias:      (obs_dim,)
      log_scale: (obs_dim,)
    Returns:
      NormalParams(loc=(num_steps, obs_dim), scale=(obs_dim,))
    """
    num_steps, num_states = z.shape
    s_dim, obs_dim = weight.shape
    assert s_dim == num_states

    r = _pack_factor(num_steps, num_states, obs_dim)
    n_rows = num_steps // r
    block = _resolve_block_rows(n_rows, block_rows)

    w_bd, b_packed = _packed_weights(weight, bias, r)
    # Contiguous row-major view: row p holds steps p*r .. p*r+r-1 side by side.
    z_packed = z.astype(jnp.float32).reshape(n_rows, r * num_states)

    loc_packed = pl.pallas_call(
        _z_loc_kernel,
        out_shape=jax.ShapeDtypeStruct((n_rows, r * obs_dim), out_dtype),
        grid=(n_rows // block,),
        in_specs=[
            pl.BlockSpec((block, r * num_states), lambda i: (i, 0)),       # z tile
            pl.BlockSpec((r * num_states, r * obs_dim), lambda i: (0, 0)),  # W (resident)
            pl.BlockSpec((1, r * obs_dim), lambda i: (0, 0)),               # bias
        ],
        out_specs=pl.BlockSpec((block, r * obs_dim), lambda i: (i, 0)),
        compiler_params=pltpu.CompilerParams(
            dimension_semantics=("parallel",)),
    )(z_packed, w_bd, b_packed)

    loc = loc_packed.reshape(num_steps, obs_dim)
    scale = jnp.exp(log_scale.astype(jnp.float32))
    return NormalParams(loc=loc, scale=scale)


def hmm_forward_from_ids(state_ids, weight, bias, log_scale, *,
                         block_rows=None, out_dtype=jnp.float32):
    """Observation-model params from int32 state ids (num_steps,) -- the
    sampling-path entry point; only 4 B/step of input HBM traffic."""
    num_steps = state_ids.shape[0]
    num_states, obs_dim = weight.shape
    assert num_states <= 256, "exact-int one-hot rebuild assumes num_states <= 256"

    r = _pack_factor(num_steps, num_states, obs_dim)
    n_rows = num_steps // r
    block = _resolve_block_rows(n_rows, block_rows)

    w_bd, b_packed = _packed_weights(weight, bias, r)
    ids_packed = state_ids.astype(jnp.int32).reshape(n_rows, r)
    # E[j, c] = 1 if c // S == j  (replicates each id S times along lanes).
    e_mat = jnp.repeat(jnp.eye(r, dtype=jnp.float32), num_states, axis=1)
    # code[0, c] = c % S  (state index for every packed column).
    code = jnp.tile(jnp.arange(num_states, dtype=jnp.float32),
                    r).reshape(1, r * num_states)

    loc_packed = pl.pallas_call(
        _ids_loc_kernel,
        out_shape=jax.ShapeDtypeStruct((n_rows, r * obs_dim), out_dtype),
        grid=(n_rows // block,),
        in_specs=[
            pl.BlockSpec((block, r), lambda i: (i, 0)),                      # ids tile
            pl.BlockSpec((r, r * num_states), lambda i: (0, 0)),             # E (resident)
            pl.BlockSpec((1, r * num_states), lambda i: (0, 0)),             # code
            pl.BlockSpec((r * num_states, r * obs_dim), lambda i: (0, 0)),   # W (resident)
            pl.BlockSpec((1, r * obs_dim), lambda i: (0, 0)),                # bias
        ],
        out_specs=pl.BlockSpec((block, r * obs_dim), lambda i: (i, 0)),
        compiler_params=pltpu.CompilerParams(
            dimension_semantics=("parallel",)),
    )(ids_packed, e_mat, code, w_bd, b_packed)

    loc = loc_packed.reshape(num_steps, obs_dim)
    scale = jnp.exp(log_scale.astype(jnp.float32))
    return NormalParams(loc=loc, scale=scale)


# TODO(synk): sample()/sample_variables()/p_z() need MarkovChain ancestral
# sampling and torch.distributions objects; only the deterministic forward
# pass (observation-distribution parameters) is kernelized.


# ---------------------------------------------------------------------------
# Demo / correctness check
# ---------------------------------------------------------------------------
if __name__ == "__main__":
    num_steps = 2048   # sequence length
    num_states = 4     # hidden states
    obs_dim = 16       # observation dimension (packed 8 steps/row -> 128 lanes)

    key = jax.random.PRNGKey(0)
    k_states, k_w, k_b, k_ls = jax.random.split(key, 4)

    # Deterministic hidden-state sequence and its one-hot encoding.
    state_ids = jax.random.categorical(
        k_states, jnp.zeros((num_steps, num_states)), axis=-1).astype(jnp.int32)
    z = jax.nn.one_hot(state_ids, num_states, dtype=jnp.float32)

    # Observation-model parameters.
    weight = 0.1 * jax.random.normal(k_w, (num_states, obs_dim), jnp.float32)
    bias = 0.05 * jax.random.normal(k_b, (obs_dim,), jnp.float32)
    log_scale = 0.01 * jax.random.normal(k_ls, (obs_dim,), jnp.float32)

    # Reference in plain JAX.
    ref_loc = z @ weight + bias
    ref_scale = jnp.exp(log_scale)

    # forward(z) path (one-hot input, per the module spec), packed lane-dense.
    dist_params = hmm_forward(z, weight, bias, log_scale)
    jax.block_until_ready(dist_params)
    assert jnp.allclose(dist_params.loc, ref_loc, atol=1e-5, rtol=1e-5)
    assert jnp.allclose(dist_params.scale, ref_scale, atol=1e-6, rtol=1e-6)

    # Sampling-path entry point (state ids only); explicit block_rows exercises
    # a multi-step grid (index_map + double-buffered pipelining).
    dist_params_ids = hmm_forward_from_ids(
        state_ids, weight, bias, log_scale, block_rows=64)
    jax.block_until_ready(dist_params_ids)
    assert jnp.allclose(dist_params_ids.loc, ref_loc, atol=1e-5, rtol=1e-5)
    assert jnp.allclose(dist_params_ids.scale, ref_scale, atol=1e-6, rtol=1e-6)

    # Unpacked fallback path (num_steps not divisible by the pack factor).
    ns2 = 36
    dist_small = hmm_forward(z[:ns2], weight, bias, log_scale)
    dist_small_ids = hmm_forward_from_ids(state_ids[:ns2], weight, bias, log_scale)
    jax.block_until_ready((dist_small, dist_small_ids))
    assert jnp.allclose(dist_small.loc, ref_loc[:ns2], atol=1e-5, rtol=1e-5)
    assert jnp.allclose(dist_small_ids.loc, ref_loc[:ns2], atol=1e-5, rtol=1e-5)

    print("KERNEL_OK")
</pallas_src>

<mosaic_0001>
module attributes {stable_mosaic.version = 11 : i64} {
  func.func @_z_loc_kernel(%arg0: i32, %arg1: memref<256x32xf32, #tpu.memory_space<vmem>>, %arg2: memref<32x128xf32, #tpu.memory_space<vmem>>, %arg3: memref<1x128xf32, #tpu.memory_space<vmem>>, %arg4: memref<256x128xf32, #tpu.memory_space<vmem>>) attributes {dimension_semantics = [#tpu.dimension_semantics<parallel>], iteration_bounds = array<i64: 1>, scalar_prefetch = 0 : i64, scratch_operands = 0 : i64, tpu.core_type = #tpu.core_type<tc>, window_params = [{transform_indices = @transform_0, window_bounds = array<i64: 256, 32>}, {pipeline_mode = #tpu.pipeline_mode<synchronous>, transform_indices = @transform_1, window_bounds = array<i64: 32, 128>}, {pipeline_mode = #tpu.pipeline_mode<synchronous>, transform_indices = @transform_2, window_bounds = array<i64: 1, 128>}, {transform_indices = @transform_3, window_bounds = array<i64: 256, 128>}]} {
    %c0 = arith.constant 0 : index
    %c0_0 = arith.constant 0 : index
    %0 = vector.load %arg1[%c0, %c0_0] : memref<256x32xf32, #tpu.memory_space<vmem>>, vector<256x32xf32>
    %c0_1 = arith.constant 0 : index
    %c0_2 = arith.constant 0 : index
    %1 = vector.load %arg2[%c0_1, %c0_2] : memref<32x128xf32, #tpu.memory_space<vmem>>, vector<32x128xf32>
    %cst = arith.constant dense<0.000000e+00> : vector<256x128xf32>
    %2 = tpu.matmul %0, %1, %cst {dimension_numbers = #tpu.dot_dimension_numbers<[1], [0], [0], [1], [0, 0, 1, 1], [], []>} : vector<256x32xf32>, vector<32x128xf32>, vector<256x128xf32> -> vector<256x128xf32>
    %c0_3 = arith.constant 0 : index
    %c0_4 = arith.constant 0 : index
    %3 = vector.load %arg3[%c0_3, %c0_4] : memref<1x128xf32, #tpu.memory_space<vmem>>, vector<1x128xf32>
    %4 = vector.broadcast %3 : vector<1x128xf32> to vector<256x128xf32>
    %5 = arith.addf %2, %4 : vector<256x128xf32>
    %c0_5 = arith.constant 0 : index
    %c0_6 = arith.constant 0 : index
    %6 = vector.load %arg4[%c0_5, %c0_6] : memref<256x128xf32, #tpu.memory_space<vmem>>, vector<256x128xf32>
    tpu.vector_store %arg4[%c0_5, %c0_6], %5 {strides = array<i32>} : memref<256x128xf32, #tpu.memory_space<vmem>>, vector<256x128xf32>,
    return
  }
  func.func @transform_0(%arg0: i32) -> (i32, i32) {
    %c0_i32 = arith.constant 0 : i32
    %c0_i32_0 = arith.constant 0 : i32
    return %arg0, %c0_i32 : i32, i32
  }
  func.func @transform_1(%arg0: i32) -> (i32, i32) {
    %c0_i32 = arith.constant 0 : i32
    %c0_i32_0 = arith.constant 0 : i32
    %c0_i32_1 = arith.constant 0 : i32
    return %c0_i32, %c0_i32_0 : i32, i32
  }
  func.func @transform_2(%arg0: i32) -> (i32, i32) {
    %c0_i32 = arith.constant 0 : i32
    %c0_i32_0 = arith.constant 0 : i32
    %c0_i32_1 = arith.constant 0 : i32
    return %c0_i32, %c0_i32_0 : i32, i32
  }
  func.func @transform_3(%arg0: i32) -> (i32, i32) {
    %c0_i32 = arith.constant 0 : i32
    %c0_i32_0 = arith.constant 0 : i32
    return %arg0, %c0_i32 : i32, i32
  }
}

</mosaic_0001>

<llo_original>
// kernel: tpu_custom_call.1
$region0: #{tpu_custom_call.1}
  #allocation0 [shape = 'u32[]', space=smem, size = 0x4, offset = 0x4, fixed_abs, tag = 'smem constant byte address 0x4 - core index']
  #allocation1 [shape = 'u32[144,128]{1,0:T(1,128)}', space=vmem, size = 0x12000, scoped, tag = 'internal scratch']
  %s0 = inlined_call_operand.vmem [shape: f32[256,32], index: 0, kind: input, shape index: {}]
  %s1 = inlined_call_operand.vmem [shape: f32[32,128], index: 1, kind: input, shape index: {}]
  %s2 = inlined_call_operand.vmem [shape: f32[1,128], index: 2, kind: input, shape index: {}]
  %s3 = inlined_call_operand.hbm [shape: f32[256,128], index: 3, kind: output, shape index: {}]
  %s4 = sld [smem:[#allocation0]]
  $region22: #{tpu_custom_call.1} parent=0
    _
  %s6 = ssub.s32 1, %s4
  %s7 = scalar_select 0, %s6, %s4
  $region1: #{tpu_custom_call.1} parent=0
    #allocation2 [shape = 'u8[131072]{0}', space=vmem, size = 0x20000, scoped, tag = 'output window, operand 0, single buffered']
    #allocation3 [shape = 's32[1]{0}', space=sflag, size = 0x4, scoped, tag = 'scoped memory for tpu_custom_call.1']
    %8 = vsyncpa [#allocation3], 0
    // Predicated region
    $region2: #{tpu_custom_call.1} parent=1 // pred_check
      _
    $region3: #{tpu_custom_call.1} parent=1 // pred_check_branch
      %10 = sbr.rel (0) target = $region5
    $region4: #{tpu_custom_call.1} parent=1 // pred_region
      _
    $region5: #{tpu_custom_call.1} parent=1 // pred_fallthru
      _
    // Predicated region
    $region6: #{tpu_custom_call.1} parent=1 // pred_check
      _
    $region7: #{tpu_custom_call.1} parent=1 // pred_check_branch
      %12 = sbr.rel (0) target = $region9
    $region8: #{tpu_custom_call.1} parent=1 // pred_region
      _
    $region9: #{tpu_custom_call.1} parent=1 // pred_fallthru
      _
    // Predicated region
    $region10: #{tpu_custom_call.1} parent=1 // pred_check
      _
    $region11: #{tpu_custom_call.1} parent=1 // pred_check_branch
      %14 = sbr.rel (0) target = $region13
    $region12: #{tpu_custom_call.1} parent=1 // pred_region
      _
    $region13: #{tpu_custom_call.1} parent=1 // pred_fallthru
      _
    %v15 = vld [vmem:[%s0] sm:$0xff]
    %v16 = vld [vmem:[%s0 + $0x8] sm:$0xff]
    %v17 = vld [vmem:[%s0 + $0x10] sm:$0xff]
    %v18 = vld [vmem:[%s0 + $0x18] sm:$0xff]
    %v19 = vld [vmem:[%s0 + $0x20] sm:$0xff]
    %v20 = vld [vmem:[%s0 + $0x28] sm:$0xff]
    %v21 = vld [vmem:[%s0 + $0x30] sm:$0xff]
    %v22 = vld [vmem:[%s0 + $0x38] sm:$0xff]
    %v23 = vld [vmem:[%s0 + $0x40] sm:$0xff]
    %v24 = vld [vmem:[%s0 + $0x48] sm:$0xff]
    %v25 = vld [vmem:[%s0 + $0x50] sm:$0xff]
    %v26 = vld [vmem:[%s0 + $0x58] sm:$0xff]
    %v27 = vld [vmem:[%s0 + $0x60] sm:$0xff]
    %v28 = vld [vmem:[%s0 + $0x68] sm:$0xff]
    %v29 = vld [vmem:[%s0 + $0x70] sm:$0xff]
    %v30 = vld [vmem:[%s0 + $0x78] sm:$0xff]
    %v31 = vld [vmem:[%s0 + $0x80] sm:$0xff]
    %v32 = vld [vmem:[%s0 + $0x88] sm:$0xff]
    %v33 = vld [vmem:[%s0 + $0x90] sm:$0xff]
    %v34 = vld [vmem:[%s0 + $0x98] sm:$0xff]
    %v35 = vld [vmem:[%s0 + $0xa0] sm:$0xff]
    %v36 = vld [vmem:[%s0 + $0xa8] sm:$0xff]
    %v37 = vld [vmem:[%s0 + $0xb0] sm:$0xff]
    %v38 = vld [vmem:[%s0 + $0xb8] sm:$0xff]
    %v39 = vld [vmem:[%s0 + $0xc0] sm:$0xff]
    %v40 = vld [vmem:[%s0 + $0xc8] sm:$0xff]
    %v41 = vld [vmem:[%s0 + $0xd0] sm:$0xff]
    %v42 = vld [vmem:[%s0 + $0xd8] sm:$0xff]
    %v43 = vld [vmem:[%s0 + $0xe0] sm:$0xff]
    %v44 = vld [vmem:[%s0 + $0xe8] sm:$0xff]
    %v45 = vld [vmem:[%s0 + $0xf0] sm:$0xff]
    %v46 = vld [vmem:[%s0 + $0xf8] sm:$0xff]
    %v47 = vld [vmem:[%s1] sm:$0xff]
    %v48 = vld [vmem:[%s1 + $0x8] sm:$0xff]
    %v49 = vld [vmem:[%s1 + $0x10] sm:$0xff]
    %v50 = vld [vmem:[%s1 + $0x18] sm:$0xff]
    %v51 = vld [vmem:[%s2] sm:$0x1]
    %v53 = vlaneseq
    %v54 = vshrl.u32 %v53, 7
    %v55 = vsub.s32 0, %v54
    %v56 = vrot.slane %v51, %v55
    %vm58 = vcmask 261120
    %v60 = vsel %vm58, %v15, 0
    %v63 = vsel %vm58, %v16, 0
    %v66 = vsel %vm58, %v17, 0
    %v69 = vsel %vm58, %v18, 0
    %v72 = vsel %vm58, %v19, 0
    %v75 = vsel %vm58, %v20, 0
    %v78 = vsel %vm58, %v21, 0
    %v81 = vsel %vm58, %v22, 0
    %v84 = vsel %vm58, %v23, 0
    %v87 = vsel %vm58, %v24, 0
    %v90 = vsel %vm58, %v25, 0
    %v93 = vsel %vm58, %v26, 0
    %v96 = vsel %vm58, %v27, 0
    %v99 = vsel %vm58, %v28, 0
    %v102 = vsel %vm58, %v29, 0
    %v105 = vsel %vm58, %v30, 0
    %v108 = vsel %vm58, %v31, 0
    %v111 = vsel %vm58, %v32, 0
    %v114 = vsel %vm58, %v33, 0
    %v117 = vsel %vm58, %v34, 0
    %v120 = vsel %vm58, %v35, 0
    %v123 = vsel %vm58, %v36, 0
    %v126 = vsel %vm58, %v37, 0
    %v129 = vsel %vm58, %v38, 0
    %v132 = vsel %vm58, %v39, 0
    %v135 = vsel %vm58, %v40, 0
    %v138 = vsel %vm58, %v41, 0
    %v141 = vsel %vm58, %v42, 0
    %v144 = vsel %vm58, %v43, 0
    %v147 = vsel %vm58, %v44, 0
    %v150 = vsel %vm58, %v45, 0
    %v153 = vsel %vm58, %v46, 0
    %155 = vmatprep.subr.mxu0 0.0
    %156 = vmatpush1.msra.mxu0 0.0
    %157 = vmatprep.subr.mxu0 0.0
    %158 = vmatpush1.msra.mxu0 0.0
    %159 = vmatprep.subr.mxu0 0.0
    %160 = vmatpush1.msra.mxu0 0.0
    %161 = vmatprep.subr.mxu0 0.0
    %162 = vmatpush1.msra.mxu0 0.0
    %163 = vmatprep.subr.mxu0 0.0
    %164 = vmatpush1.msra.mxu0 0.0
    %165 = vmatprep.subr.mxu0 0.0
    %166 = vmatpush1.msra.mxu0 0.0
    %167 = vmatprep.subr.mxu0 0.0
    %168 = vmatpush1.msra.mxu0 0.0
    %169 = vmatprep.subr.mxu0 0.0
    %170 = vmatpush1.msra.mxu0 0.0
    %171 = vmatprep.subr.mxu0 0.0
    %172 = vmatpush1.msra.mxu0 0.0
    %173 = vmatprep.subr.mxu0 0.0
    %174 = vmatpush1.msra.mxu0 0.0
    %175 = vmatprep.subr.mxu0 0.0
    %176 = vmatpush1.msra.mxu0 0.0
    %177 = vmatprep.subr.mxu0 0.0
    %178 = vmatpush1.msra.mxu0 0.0
    %179 = vmatprep.subr.mxu0 0.0
    %180 = vmatpush1.msra.mxu0 %v50
    %181 = vmatprep.subr.mxu0 0.0
    %182 = vmatpush1.msra.mxu0 %v49
    %183 = vmatprep.subr.mxu0 0.0
    %184 = vmatpush1.msra.mxu0 %v48
    %185 = vmatprep.subr.mxu0 0.0
    %186 = vmatpush1.msra.mxu0 %v47
    %187 = vmatprep.subr.mxu0 0.0
    %188 = vmatpush2.msra.mxu0 0.0
    %189 = vmatprep.subr.mxu0 0.0
    %190 = vmatpush2.msra.mxu0 0.0
    %191 = vmatprep.subr.mxu0 0.0
    %192 = vmatpush2.msra.mxu0 0.0
    %193 = vmatprep.subr.mxu0 0.0
    %194 = vmatpush2.msra.mxu0 0.0
    %195 = vmatprep.subr.mxu0 0.0
    %196 = vmatpush2.msra.mxu0 0.0
    %197 = vmatprep.subr.mxu0 0.0
    %198 = vmatpush2.msra.mxu0 0.0
    %199 = vmatprep.subr.mxu0 0.0
    %200 = vmatpush2.msra.mxu0 0.0
    %201 = vmatprep.subr.mxu0 0.0
    %202 = vmatpush2.msra.mxu0 0.0
    %203 = vmatprep.subr.mxu0 0.0
    %204 = vmatpush2.msra.mxu0 0.0
    %205 = vmatprep.subr.mxu0 0.0
    %206 = vmatpush2.msra.mxu0 0.0
    %207 = vmatprep.subr.mxu0 0.0
    %208 = vmatpush2.msra.mxu0 0.0
    %209 = vmatprep.subr.mxu0 0.0
    %210 = vmatpush2.msra.mxu0 0.0
    %211 = vmatprep.subr.mxu0 0.0
    %212 = vmatpush2.msra.mxu0 0.0
    %213 = vmatprep.subr.mxu0 0.0
    %214 = vmatpush2.msra.mxu0 0.0
    %215 = vmatprep.subr.mxu0 0.0
    %216 = vmatpush2.msra.mxu0 0.0
    %217 = vmatprep.subr.mxu0 0.0
    %218 = vmatpush2.msra.mxu0 0.0
    %219 = vmatprep.mubr.f32.mxu0 0.0
    %220 = vmatmul.mubr.f32.gmra.mxu0 %v60
    %v221 = vpop.f32.mrf.mxu0
    %v222 = vadd.f32 %v56, %v221
    %v223 = vpop.f32.mrf.mxu0
    %224 = vmatprep.mubr.f32.mxu0 0.0
    %225 = vmatmul.mubr.f32.gmra.mxu0 %v63
    %v226 = vpop.f32.mrf.mxu0
    %v227 = vadd.f32 %v56, %v226
    %v228 = vpop.f32.mrf.mxu0
    %229 = vmatprep.mubr.f32.mxu0 0.0
    %230 = vmatmul.mubr.f32.gmra.mxu0 %v66
    %v231 = vpop.f32.mrf.mxu0
    %v232 = vadd.f32 %v56, %v231
    %v233 = vpop.f32.mrf.mxu0
    %234 = vmatprep.mubr.f32.mxu0 0.0
    %235 = vmatmul.mubr.f32.gmra.mxu0 %v69
    %v236 = vpop.f32.mrf.mxu0
    %v237 = vadd.f32 %v56, %v236
    %v238 = vpop.f32.mrf.mxu0
    %239 = vmatprep.mubr.f32.mxu0 0.0
    %240 = vmatmul.mubr.f32.gmra.mxu0 %v72
    %v241 = vpop.f32.mrf.mxu0
    %v242 = vadd.f32 %v56, %v241
    %v243 = vpop.f32.mrf.mxu0
    %244 = vmatprep.mubr.f32.mxu0 0.0
    %245 = vmatmul.mubr.f32.gmra.mxu0 %v75
    %v246 = vpop.f32.mrf.mxu0
    %v247 = vadd.f32 %v56, %v246
    %v248 = vpop.f32.mrf.mxu0
    %249 = vmatprep.mubr.f32.mxu0 0.0
    %250 = vmatmul.mubr.f32.gmra.mxu0 %v78
    %v251 = vpop.f32.mrf.mxu0
    %v252 = vadd.f32 %v56, %v251
    %v253 = vpop.f32.mrf.mxu0
    %254 = vmatprep.mubr.f32.mxu0 0.0
    %255 = vmatmul.mubr.f32.gmra.mxu0 %v81
    %v256 = vpop.f32.mrf.mxu0
    %v257 = vadd.f32 %v56, %v256
    %v258 = vpop.f32.mrf.mxu0
    %259 = vmatprep.mubr.f32.mxu0 0.0
    %260 = vmatmul.mubr.f32.gmra.mxu0 %v84
    %v261 = vpop.f32.mrf.mxu0
    %v262 = vadd.f32 %v56, %v261
    %v263 = vpop.f32.mrf.mxu0
    %264 = vmatprep.mubr.f32.mxu0 0.0
    %265 = vmatmul.mubr.f32.gmra.mxu0 %v87
    %v266 = vpop.f32.mrf.mxu0
    %v267 = vadd.f32 %v56, %v266
    %v268 = vpop.f32.mrf.mxu0
    %269 = vmatprep.mubr.f32.mxu0 0.0
    %270 = vmatmul.mubr.f32.gmra.mxu0 %v90
    %v271 = vpop.f32.mrf.mxu0
    %v272 = vadd.f32 %v56, %v271
    %v273 = vpop.f32.mrf.mxu0
    %274 = vmatprep.mubr.f32.mxu0 0.0
    %275 = vmatmul.mubr.f32.gmra.mxu0 %v93
    %v276 = vpop.f32.mrf.mxu0
    %v277 = vadd.f32 %v56, %v276
    %v278 = vpop.f32.mrf.mxu0
    %279 = vmatprep.mubr.f32.mxu0 0.0
    %280 = vmatmul.mubr.f32.gmra.mxu0 %v96
    %v281 = vpop.f32.mrf.mxu0
    %v282 = vadd.f32 %v56, %v281
    %v283 = vpop.f32.mrf.mxu0
    %284 = vmatprep.mubr.f32.mxu0 0.0
    %285 = vmatmul.mubr.f32.gmra.mxu0 %v99
    %v286 = vpop.f32.mrf.mxu0
    %v287 = vadd.f32 %v56, %v286
    %v288 = vpop.f32.mrf.mxu0
    %289 = vmatprep.mubr.f32.mxu0 0.0
    %290 = vmatmul.mubr.f32.gmra.mxu0 %v102
    %v291 = vpop.f32.mrf.mxu0
    %v292 = vadd.f32 %v56, %v291
    %v293 = vpop.f32.mrf.mxu0
    %294 = vmatprep.mubr.f32.mxu0 0.0
    %295 = vmatmul.mubr.f32.gmra.mxu0 %v105
    %v296 = vpop.f32.mrf.mxu0
    %v297 = vadd.f32 %v56, %v296
    %v298 = vpop.f32.mrf.mxu0
    %299 = vmatprep.mubr.f32.mxu0 0.0
    %300 = vmatmul.mubr.f32.gmra.mxu0 %v108
    %v301 = vpop.f32.mrf.mxu0
    %v302 = vadd.f32 %v56, %v301
    %v303 = vpop.f32.mrf.mxu0
    %304 = vmatprep.mubr.f32.mxu0 0.0
    %305 = vmatmul.mubr.f32.gmra.mxu0 %v111
    %v306 = vpop.f32.mrf.mxu0
    %v307 = vadd.f32 %v56, %v306
    %v308 = vpop.f32.mrf.mxu0
    %309 = vmatprep.mubr.f32.mxu0 0.0
    %310 = vmatmul.mubr.f32.gmra.mxu0 %v114
    %v311 = vpop.f32.mrf.mxu0
    %v312 = vadd.f32 %v56, %v311
    %v313 = vpop.f32.mrf.mxu0
    %314 = vmatprep.mubr.f32.mxu0 0.0
    %315 = vmatmul.mubr.f32.gmra.mxu0 %v117
    %v316 = vpop.f32.mrf.mxu0
    %v317 = vadd.f32 %v56, %v316
    %v318 = vpop.f32.mrf.mxu0
    %319 = vmatprep.mubr.f32.mxu0 0.0
    %320 = vmatmul.mubr.f32.gmra.mxu0 %v120
    %v321 = vpop.f32.mrf.mxu0
    %v322 = vadd.f32 %v56, %v321
    %v323 = vpop.f32.mrf.mxu0
    %324 = vmatprep.mubr.f32.mxu0 0.0
    %325 = vmatmul.mubr.f32.gmra.mxu0 %v123
    %v326 = vpop.f32.mrf.mxu0
    %v327 = vadd.f32 %v56, %v326
    %v328 = vpop.f32.mrf.mxu0
    %329 = vmatprep.mubr.f32.mxu0 0.0
    %330 = vmatmul.mubr.f32.gmra.mxu0 %v126
    %v331 = vpop.f32.mrf.mxu0
    %v332 = vadd.f32 %v56, %v331
    %v333 = vpop.f32.mrf.mxu0
    %334 = vmatprep.mubr.f32.mxu0 0.0
    %335 = vmatmul.mubr.f32.gmra.mxu0 %v129
    %v336 = vpop.f32.mrf.mxu0
    %v337 = vadd.f32 %v56, %v336
    %v338 = vpop.f32.mrf.mxu0
    %339 = vmatprep.mubr.f32.mxu0 0.0
    %340 = vmatmul.mubr.f32.gmra.mxu0 %v132
    %v341 = vpop.f32.mrf.mxu0
    %v342 = vadd.f32 %v56, %v341
    %v343 = vpop.f32.mrf.mxu0
    %344 = vmatprep.mubr.f32.mxu0 0.0
    %345 = vmatmul.mubr.f32.gmra.mxu0 %v135
    %v346 = vpop.f32.mrf.mxu0
    %v347 = vadd.f32 %v56, %v346
    %v348 = vpop.f32.mrf.mxu0
    %349 = vmatprep.mubr.f32.mxu0 0.0
    %350 = vmatmul.mubr.f32.gmra.mxu0 %v138
    %v351 = vpop.f32.mrf.mxu0
    %v352 = vadd.f32 %v56, %v351
    %v353 = vpop.f32.mrf.mxu0
    %354 = vmatprep.mubr.f32.mxu0 0.0
    %355 = vmatmul.mubr.f32.gmra.mxu0 %v141
    %v356 = vpop.f32.mrf.mxu0
    %v357 = vadd.f32 %v56, %v356
    %v358 = vpop.f32.mrf.mxu0
    %359 = vmatprep.mubr.f32.mxu0 0.0
    %360 = vmatmul.mubr.f32.gmra.mxu0 %v144
    %v361 = vpop.f32.mrf.mxu0
    %v362 = vadd.f32 %v56, %v361
    %v363 = vpop.f32.mrf.mxu0
    %364 = vmatprep.mubr.f32.mxu0 0.0
    %365 = vmatmul.mubr.f32.gmra.mxu0 %v147
    %v366 = vpop.f32.mrf.mxu0
    %v367 = vadd.f32 %v56, %v366
    %v368 = vpop.f32.mrf.mxu0
    %369 = vmatprep.mubr.f32.mxu0 0.0
    %370 = vmatmul.mubr.f32.gmra.mxu0 %v150
    %v371 = vpop.f32.mrf.mxu0
    %v372 = vadd.f32 %v56, %v371
    %v373 = vpop.f32.mrf.mxu0
    %374 = vmatprep.mubr.f32.mxu0 0.0
    %375 = vmatmul.mubr.f32.gmra.mxu0 %v153
    %v376 = vpop.f32.mrf.mxu0
    %v377 = vadd.f32 %v56, %v376
    %v378 = vpop.f32.mrf.mxu0
    %379 = vdwg.mxu0
    %380 = vst [vmem:[#allocation2] sm:$0xff] %v222
    %381 = vst [vmem:[#allocation2 + $0x8] sm:$0xff] %v227
    %382 = vst [vmem:[#allocation2 + $0x10] sm:$0xff] %v232
    %383 = vst [vmem:[#allocation2 + $0x18] sm:$0xff] %v237
    %384 = vst [vmem:[#allocation2 + $0x20] sm:$0xff] %v242
    %385 = vst [vmem:[#allocation2 + $0x28] sm:$0xff] %v247
    %386 = vst [vmem:[#allocation2 + $0x30] sm:$0xff] %v252
    %387 = vst [vmem:[#allocation2 + $0x38] sm:$0xff] %v257
    %388 = vst [vmem:[#allocation2 + $0x40] sm:$0xff] %v262
    %389 = vst [vmem:[#allocation2 + $0x48] sm:$0xff] %v267
    %390 = vst [vmem:[#allocation2 + $0x50] sm:$0xff] %v272
    %391 = vst [vmem:[#allocation2 + $0x58] sm:$0xff] %v277
    %392 = vst [vmem:[#allocation2 + $0x60] sm:$0xff] %v282
    %393 = vst [vmem:[#allocation2 + $0x68] sm:$0xff] %v287
    %394 = vst [vmem:[#allocation2 + $0x70] sm:$0xff] %v292
    %395 = vst [vmem:[#allocation2 + $0x78] sm:$0xff] %v297
    %396 = vst [vmem:[#allocation2 + $0x80] sm:$0xff] %v302
    %397 = vst [vmem:[#allocation2 + $0x88] sm:$0xff] %v307
    %398 = vst [vmem:[#allocation2 + $0x90] sm:$0xff] %v312
    %399 = vst [vmem:[#allocation2 + $0x98] sm:$0xff] %v317
    %400 = vst [vmem:[#allocation2 + $0xa0] sm:$0xff] %v322
    %401 = vst [vmem:[#allocation2 + $0xa8] sm:$0xff] %v327
    %402 = vst [vmem:[#allocation2 + $0xb0] sm:$0xff] %v332
    %403 = vst [vmem:[#allocation2 + $0xb8] sm:$0xff] %v337
    %404 = vst [vmem:[#allocation2 + $0xc0] sm:$0xff] %v342
    %405 = vst [vmem:[#allocation2 + $0xc8] sm:$0xff] %v347
    %406 = vst [vmem:[#allocation2 + $0xd0] sm:$0xff] %v352
    %407 = vst [vmem:[#allocation2 + $0xd8] sm:$0xff] %v357
    %408 = vst [vmem:[#allocation2 + $0xe0] sm:$0xff] %v362
    %409 = vst [vmem:[#allocation2 + $0xe8] sm:$0xff] %v367
    %410 = vst [vmem:[#allocation2 + $0xf0] sm:$0xff] %v372
    %411 = vst [vmem:[#allocation2 + $0xf8] sm:$0xff] %v377
    // Predicated region
    $region14: #{tpu_custom_call.1} parent=1 // pred_check
      _
    $region15: #{tpu_custom_call.1} parent=1 // pred_check_branch
      %413 = sbr.rel (0) target = $region17
    $region16: #{tpu_custom_call.1} parent=1 // pred_region
      %s415 = ssub.s32 4096, 4096
      %416 = vsyncadd [#allocation3], %s415
      %s417 = sshll.u32 [#allocation2], 4
      %s418 = int_to_ptr.vmem [resolvable:$true] %s417
      %423 = dma.vmem_to_hbm [thread:$0]  %s418, 4096, %s3, [#allocation3], 128, 128, 8
    $region17: #{tpu_custom_call.1} parent=1 // pred_fallthru
      _
    // Predicated region
    $region18: #{tpu_custom_call.1} parent=1 // pred_check
      _
    $region19: #{tpu_custom_call.1} parent=1 // pred_check_branch
      %425 = sbr.rel (0) target = $region21
    $region20: #{tpu_custom_call.1} parent=1 // pred_region
      %426 = dma.done [#allocation3], 4096
    $region21: #{tpu_custom_call.1} parent=1 // pred_fallthru
      _
    %427 = vsyncpa [#allocation3], 1

</llo_original>
